<compile_context>
chip_gen: v6e
topology: v6e:2x2x1
jax: 0.10.0
libtpu: 0.0.40
codegen_flags: <defaults>
</compile_context>

<pallas_src>
import jax
import jax.numpy as jnp
from jax.experimental import pallas as pl
from jax.experimental.pallas import tpu as pltpu

HIDDEN_SIZE = 64
KAPPA = 8
INPUT_SIZE = (KAPPA + 1) * 2   # 18
OUTPUT_SIZE = 9

_LANE = 128
_MIN_STEPS = 4                 # keep >= 4 grid steps at large B (v7x dual-TC)
_DEFAULT_BLOCK_B = 16384       # 8K-32K amortizes per-step pipeline overhead


def _round_up(n, m):
    return ((n + m - 1) // m) * m


def _actor_kernel(x_ref, w1T_ref, b1_ref, w2T_ref, b2_ref, oT_ref):
    # x_ref  : [TB, 18]  (natural batch-major layout, contiguous HBM DMA)
    # w1T_ref: [64, 18], b1_ref: [64, 1]
    # w2T_ref: [ 9, 64], b2_ref: [ 9, 1]
    # oT_ref : [ 9, TB]  (feature-major -> lane-dense stores)

    # Linear 1 + ReLU:  hT = relu(W1T @ x^T + b1)  -> [64, TB]
    h = jnp.dot(w1T_ref[...], x_ref[...].T, preferred_element_type=jnp.float32)
    h = jnp.maximum(h + b1_ref[...], 0.0)

    # Linear 2 + Sigmoid: yT = sigmoid(W2T @ hT + b2) -> [9, TB]
    y = jnp.dot(w2T_ref[...], h, preferred_element_type=jnp.float32) + b2_ref[...]
    oT_ref[...] = jax.nn.sigmoid(y).astype(oT_ref.dtype)


def _tile_b(B, block_b):
    """Batch tile: multiple of 128, capped so large B gives >= _MIN_STEPS steps.
    For B smaller than one tile, use the full batch as a single block (block
    dims then equal the array dims, which satisfies the (8,128) rule)."""
    tb = min(_round_up(block_b, _LANE),
             _round_up(pl.cdiv(B, _MIN_STEPS), _LANE))
    if B < tb:
        tb = B
    return tb


def actor_forward(x, w1, b1, w2, b2, *, block_b=_DEFAULT_BLOCK_B):
    """x: [B, 18] -> [B, 9], all float32.

    Params follow the same convention as before:
      w1: [18, 64], b1: [1, 64], w2: [64, 9], b2: [1, 9]
    (i.e. y = x @ W + b, equivalent to torch's x @ W.T with W [out, in]).
    """
    B = x.shape[0]
    TB = _tile_b(B, block_b)
    grid = (pl.cdiv(B, TB),)

    # Tiny parameter-only layout plumbing (18x64 / 64x9 -- negligible).
    w1T = jnp.transpose(w1)                      # [64, 18]
    w2T = jnp.transpose(w2)                      # [ 9, 64]
    b1c = jnp.reshape(b1, (HIDDEN_SIZE, 1))      # [64, 1]
    b2c = jnp.reshape(b2, (OUTPUT_SIZE, 1))      # [ 9, 1]

    yT = pl.pallas_call(
        _actor_kernel,
        out_shape=jax.ShapeDtypeStruct((OUTPUT_SIZE, B), jnp.float32),
        grid=grid,
        in_specs=[
            # x stream: natural layout, tiled along batch, double-buffered.
            pl.BlockSpec((TB, INPUT_SIZE), lambda i: (i, 0)),
            # Weights / biases: constant block index -> fetched once, resident.
            pl.BlockSpec((HIDDEN_SIZE, INPUT_SIZE), lambda i: (0, 0)),
            pl.BlockSpec((HIDDEN_SIZE, 1), lambda i: (0, 0)),
            pl.BlockSpec((OUTPUT_SIZE, HIDDEN_SIZE), lambda i: (0, 0)),
            pl.BlockSpec((OUTPUT_SIZE, 1), lambda i: (0, 0)),
        ],
        # Feature-major output: batch on lanes -> unmasked lane-dense stores.
        out_specs=pl.BlockSpec((OUTPUT_SIZE, TB), lambda i: (0, i)),
        compiler_params=pltpu.CompilerParams(
            # Batch tiles are independent -> shard across v7x's 2 TCs.
            dimension_semantics=("parallel",),
            # Headroom for the 16K-row x tile on v5e (default scoped 16 MiB).
            vmem_limit_bytes=32 * 1024 * 1024,
        ),
    )(x, w1T, b1c, w2T, b2c)

    # yT is exactly [9, B] (no padded columns exist) -> single cheap transpose.
    return jnp.transpose(yT)                     # [B, 9]


def init_params(key):
    """Deterministic init mimicking torch.nn.Linear default (uniform +/- 1/sqrt(fan_in))."""
    k1, k2, k3, k4 = jax.random.split(key, 4)
    bound1 = 1.0 / jnp.sqrt(INPUT_SIZE)
    bound2 = 1.0 / jnp.sqrt(HIDDEN_SIZE)
    w1 = jax.random.uniform(k1, (INPUT_SIZE, HIDDEN_SIZE), jnp.float32, -bound1, bound1)
    b1 = jax.random.uniform(k2, (1, HIDDEN_SIZE), jnp.float32, -bound1, bound1)
    w2 = jax.random.uniform(k3, (HIDDEN_SIZE, OUTPUT_SIZE), jnp.float32, -bound2, bound2)
    b2 = jax.random.uniform(k4, (1, OUTPUT_SIZE), jnp.float32, -bound2, bound2)
    return w1, b1, w2, b2


def _reference(x, w1, b1, w2, b2):
    h = jnp.maximum(x @ w1 + b1, 0.0)
    return jax.nn.sigmoid(h @ w2 + b2)


if __name__ == "__main__":
    key = jax.random.PRNGKey(0)
    kx, kx2, kp = jax.random.split(key, 3)

    w1, b1, w2, b2 = init_params(kp)

    # Small batch (module's typical usage) -> single full-batch block.
    B = 4
    x = jax.random.normal(kx, (B, INPUT_SIZE), jnp.float32)
    out = jax.block_until_ready(actor_forward(x, w1, b1, w2, b2))
    ref = _reference(x, w1, b1, w2, b2)
    assert out.shape == (B, OUTPUT_SIZE)
    assert jnp.allclose(out, ref, atol=1e-5, rtol=1e-5), "mismatch vs reference (B=4)"

    # Non-multiple-of-128 batch -> multi-step grid with ragged (clipped) last block.
    B2 = 300
    x2 = jax.random.normal(kx2, (B2, INPUT_SIZE), jnp.float32)
    out2 = jax.block_until_ready(actor_forward(x2, w1, b1, w2, b2))
    ref2 = _reference(x2, w1, b1, w2, b2)
    assert out2.shape == (B2, OUTPUT_SIZE)
    assert jnp.allclose(out2, ref2, atol=1e-5, rtol=1e-5), "mismatch vs reference (B=300)"

    print("KERNEL_OK")
</pallas_src>

<mosaic_0001>
module attributes {stable_mosaic.version = 11 : i64} {
  func.func @_actor_kernel(%arg0: i32, %arg1: memref<4x18xf32, #tpu.memory_space<vmem>>, %arg2: memref<64x18xf32, #tpu.memory_space<vmem>>, %arg3: memref<64x1xf32, #tpu.memory_space<vmem>>, %arg4: memref<9x64xf32, #tpu.memory_space<vmem>>, %arg5: memref<9x1xf32, #tpu.memory_space<vmem>>, %arg6: memref<9x4xf32, #tpu.memory_space<vmem>>) attributes {dimension_semantics = [#tpu.dimension_semantics<parallel>], iteration_bounds = array<i64: 1>, scalar_prefetch = 0 : i64, scratch_operands = 0 : i64, tpu.core_type = #tpu.core_type<tc>, window_params = [{transform_indices = @transform_0, window_bounds = array<i64: 4, 18>}, {pipeline_mode = #tpu.pipeline_mode<synchronous>, transform_indices = @transform_1, window_bounds = array<i64: 64, 18>}, {pipeline_mode = #tpu.pipeline_mode<synchronous>, transform_indices = @transform_2, window_bounds = array<i64: 64, 1>}, {pipeline_mode = #tpu.pipeline_mode<synchronous>, transform_indices = @transform_3, window_bounds = array<i64: 9, 64>}, {pipeline_mode = #tpu.pipeline_mode<synchronous>, transform_indices = @transform_4, window_bounds = array<i64: 9, 1>}, {transform_indices = @transform_5, window_bounds = array<i64: 9, 4>}]} {
    %c0 = arith.constant 0 : index
    %c0_0 = arith.constant 0 : index
    %0 = vector.load %arg2[%c0, %c0_0] : memref<64x18xf32, #tpu.memory_space<vmem>>, vector<64x18xf32>
    %c0_1 = arith.constant 0 : index
    %c0_2 = arith.constant 0 : index
    %1 = vector.load %arg1[%c0_1, %c0_2] : memref<4x18xf32, #tpu.memory_space<vmem>>, vector<4x18xf32>
    %2 = tpu.transpose %1, [1, 0] : vector<4x18xf32> -> vector<18x4xf32>
    %cst = arith.constant dense<0.000000e+00> : vector<64x4xf32>
    %3 = tpu.matmul %0, %2, %cst {dimension_numbers = #tpu.dot_dimension_numbers<[1], [0], [0], [1], [0, 0, 1, 1], [], []>} : vector<64x18xf32>, vector<18x4xf32>, vector<64x4xf32> -> vector<64x4xf32>
    %c0_3 = arith.constant 0 : index
    %c0_4 = arith.constant 0 : index
    %4 = vector.load %arg3[%c0_3, %c0_4] : memref<64x1xf32, #tpu.memory_space<vmem>>, vector<64x1xf32>
    %5 = vector.broadcast %4 : vector<64x1xf32> to vector<64x4xf32>
    %6 = arith.addf %3, %5 : vector<64x4xf32>
    %cst_5 = arith.constant 0.000000e+00 : f32
    %7 = vector.broadcast %cst_5 : f32 to vector<64x4xf32>
    %8 = arith.maximumf %6, %7 : vector<64x4xf32>
    %c0_6 = arith.constant 0 : index
    %c0_7 = arith.constant 0 : index
    %9 = vector.load %arg4[%c0_6, %c0_7] : memref<9x64xf32, #tpu.memory_space<vmem>>, vector<9x64xf32>
    %cst_8 = arith.constant dense<0.000000e+00> : vector<9x4xf32>
    %10 = tpu.matmul %9, %8, %cst_8 {dimension_numbers = #tpu.dot_dimension_numbers<[1], [0], [0], [1], [0, 0, 1, 1], [], []>} : vector<9x64xf32>, vector<64x4xf32>, vector<9x4xf32> -> vector<9x4xf32>
    %c0_9 = arith.constant 0 : index
    %c0_10 = arith.constant 0 : index
    %11 = vector.load %arg5[%c0_9, %c0_10] : memref<9x1xf32, #tpu.memory_space<vmem>>, vector<9x1xf32>
    %12 = vector.broadcast %11 : vector<9x1xf32> to vector<9x4xf32>
    %13 = arith.addf %10, %12 : vector<9x4xf32>
    %14 = arith.negf %13 : vector<9x4xf32>
    %15 = math.exp %14 : vector<9x4xf32>
    %cst_11 = arith.constant 1.000000e+00 : f32
    %16 = vector.broadcast %cst_11 : f32 to vector<9x4xf32>
    %17 = arith.addf %16, %15 : vector<9x4xf32>
    %18 = arith.divf %16, %17 : vector<9x4xf32>
    %c0_12 = arith.constant 0 : index
    %c0_13 = arith.constant 0 : index
    %19 = vector.load %arg6[%c0_12, %c0_13] : memref<9x4xf32, #tpu.memory_space<vmem>>, vector<9x4xf32>
    tpu.vector_store %arg6[%c0_12, %c0_13], %18 {strides = array<i32>} : memref<9x4xf32, #tpu.memory_space<vmem>>, vector<9x4xf32>,
    return
  }
  func.func @transform_0(%arg0: i32) -> (i32, i32) {
    %c0_i32 = arith.constant 0 : i32
    %c0_i32_0 = arith.constant 0 : i32
    return %arg0, %c0_i32 : i32, i32
  }
  func.func @transform_1(%arg0: i32) -> (i32, i32) {
    %c0_i32 = arith.constant 0 : i32
    %c0_i32_0 = arith.constant 0 : i32
    %c0_i32_1 = arith.constant 0 : i32
    return %c0_i32, %c0_i32_0 : i32, i32
  }
  func.func @transform_2(%arg0: i32) -> (i32, i32) {
    %c0_i32 = arith.constant 0 : i32
    %c0_i32_0 = arith.constant 0 : i32
    %c0_i32_1 = arith.constant 0 : i32
    return %c0_i32, %c0_i32_0 : i32, i32
  }
  func.func @transform_3(%arg0: i32) -> (i32, i32) {
    %c0_i32 = arith.constant 0 : i32
    %c0_i32_0 = arith.constant 0 : i32
    %c0_i32_1 = arith.constant 0 : i32
    return %c0_i32, %c0_i32_0 : i32, i32
  }
  func.func @transform_4(%arg0: i32) -> (i32, i32) {
    %c0_i32 = arith.constant 0 : i32
    %c0_i32_0 = arith.constant 0 : i32
    %c0_i32_1 = arith.constant 0 : i32
    return %c0_i32, %c0_i32_0 : i32, i32
  }
  func.func @transform_5(%arg0: i32) -> (i32, i32) {
    %c0_i32 = arith.constant 0 : i32
    %c0_i32_0 = arith.constant 0 : i32
    return %c0_i32, %arg0 : i32, i32
  }
}

</mosaic_0001>

<llo_original>
// kernel: tpu_custom_call.1
$region0: #{tpu_custom_call.1}
  #allocation0 [shape = 'u32[]', space=smem, size = 0x4, offset = 0x4, fixed_abs, tag = 'smem constant byte address 0x4 - core index']
  #allocation1 [shape = 'u32[144,128]{1,0:T(1,128)}', space=vmem, size = 0x12000, scoped, tag = 'internal scratch']
  %s0 = inlined_call_operand.vmem [shape: f32[4,18], index: 0, kind: input, shape index: {}]
  %s1 = inlined_call_operand.vmem [shape: f32[64,18], index: 1, kind: input, shape index: {}]
  %s2 = inlined_call_operand.vmem [shape: f32[64,1], index: 2, kind: input, shape index: {}]
  %s3 = inlined_call_operand.vmem [shape: f32[9,64], index: 3, kind: input, shape index: {}]
  %s4 = inlined_call_operand.vmem [shape: f32[9,1], index: 4, kind: input, shape index: {}]
  %s5 = inlined_call_operand.vmem [shape: f32[9,4], index: 5, kind: output, shape index: {}]
  %s6 = sld [smem:[#allocation0]]
  $region30: #{tpu_custom_call.1} parent=0
    _
  %s8 = ssub.s32 1, %s6
  %s9 = scalar_select 0, %s8, %s6
  // Predicated region
  $region2: #{tpu_custom_call.1} parent=0 // pred_check
    _
  $region3: #{tpu_custom_call.1} parent=0 // pred_check_branch
    %11 = sbr.rel (0) target = $region5
  $region4: #{tpu_custom_call.1} parent=0 // pred_region
    _
  $region5: #{tpu_custom_call.1} parent=0 // pred_fallthru
    _
  // Predicated region
  $region6: #{tpu_custom_call.1} parent=0 // pred_check
    _
  $region7: #{tpu_custom_call.1} parent=0 // pred_check_branch
    %13 = sbr.rel (0) target = $region9
  $region8: #{tpu_custom_call.1} parent=0 // pred_region
    _
  $region9: #{tpu_custom_call.1} parent=0 // pred_fallthru
    _
  // Predicated region
  $region10: #{tpu_custom_call.1} parent=0 // pred_check
    _
  $region11: #{tpu_custom_call.1} parent=0 // pred_check_branch
    %15 = sbr.rel (0) target = $region13
  $region12: #{tpu_custom_call.1} parent=0 // pred_region
    _
  $region13: #{tpu_custom_call.1} parent=0 // pred_fallthru
    _
  // Predicated region
  $region14: #{tpu_custom_call.1} parent=0 // pred_check
    _
  $region15: #{tpu_custom_call.1} parent=0 // pred_check_branch
    %17 = sbr.rel (0) target = $region17
  $region16: #{tpu_custom_call.1} parent=0 // pred_region
    _
  $region17: #{tpu_custom_call.1} parent=0 // pred_fallthru
    _
  // Predicated region
  $region18: #{tpu_custom_call.1} parent=0 // pred_check
    _
  $region19: #{tpu_custom_call.1} parent=0 // pred_check_branch
    %19 = sbr.rel (0) target = $region21
  $region20: #{tpu_custom_call.1} parent=0 // pred_region
    _
  $region21: #{tpu_custom_call.1} parent=0 // pred_fallthru
    _
  %v20 = vld [vmem:[%s1] sm:$0xff]
  %v21 = vld [vmem:[%s1 + $0x8] sm:$0xff]
  %v22 = vld [vmem:[%s1 + $0x10] sm:$0xff]
  %v23 = vld [vmem:[%s1 + $0x18] sm:$0xff]
  %v24 = vld [vmem:[%s1 + $0x20] sm:$0xff]
  %v25 = vld [vmem:[%s1 + $0x28] sm:$0xff]
  %v26 = vld [vmem:[%s1 + $0x30] sm:$0xff]
  %v27 = vld [vmem:[%s1 + $0x38] sm:$0xff]
  %v28 = vld [vmem:[%s0] sm:$0xf]
  %v29 = vld [vmem:[%s2] sm:$0xff]
  %v30 = vld [vmem:[%s2 + $0x8] sm:$0xff]
  %v31 = vld [vmem:[%s2 + $0x10] sm:$0xff]
  %v32 = vld [vmem:[%s2 + $0x18] sm:$0xff]
  %v33 = vld [vmem:[%s2 + $0x20] sm:$0xff]
  %v34 = vld [vmem:[%s2 + $0x28] sm:$0xff]
  %v35 = vld [vmem:[%s2 + $0x30] sm:$0xff]
  %v36 = vld [vmem:[%s2 + $0x38] sm:$0xff]
  %38 = vset.pattern.permute.xlu0 0
  %39 = vperm.xlu0 %38, %v29
  %v40 = vpop.permute.xlu0 %39
  %43 = vset.pattern.permute.xlu0 0
  %44 = vperm.xlu0 %43, %v30
  %v45 = vpop.permute.xlu0 %44
  %48 = vset.pattern.permute.xlu0 0
  %49 = vperm.xlu0 %48, %v31
  %v50 = vpop.permute.xlu0 %49
  %53 = vset.pattern.permute.xlu0 0
  %54 = vperm.xlu0 %53, %v32
  %v55 = vpop.permute.xlu0 %54
  %58 = vset.pattern.permute.xlu0 0
  %59 = vperm.xlu0 %58, %v33
  %v60 = vpop.permute.xlu0 %59
  %63 = vset.pattern.permute.xlu0 0
  %64 = vperm.xlu0 %63, %v34
  %v65 = vpop.permute.xlu0 %64
  %68 = vset.pattern.permute.xlu0 0
  %69 = vperm.xlu0 %68, %v35
  %v70 = vpop.permute.xlu0 %69
  %73 = vset.pattern.permute.xlu0 0
  %74 = vperm.xlu0 %73, %v36
  %v75 = vpop.permute.xlu0 %74
  %vm77 = vcmask 146432
  %v79 = vsel %vm77, %v20, 0
  %v82 = vsel %vm77, %v21, 0
  %v85 = vsel %vm77, %v22, 0
  %v88 = vsel %vm77, %v23, 0
  %v91 = vsel %vm77, %v24, 0
  %v94 = vsel %vm77, %v25, 0
  %v97 = vsel %vm77, %v26, 0
  %v100 = vsel %vm77, %v27, 0
  %v103 = vsel %vm77, %v28, 0
  %105 = vmatprep.subr.mxu0 0.0
  %106 = vmatpush1.xpose.msra.mxu0 0.0
  %107 = vmatprep.subr.mxu0 0.0
  %108 = vmatpush1.xpose.msra.mxu0 0.0
  %109 = vmatprep.subr.mxu0 0.0
  %110 = vmatpush1.xpose.msra.mxu0 0.0
  %111 = vmatprep.subr.mxu0 0.0
  %112 = vmatpush1.xpose.msra.mxu0 0.0
  %113 = vmatprep.subr.mxu0 0.0
  %114 = vmatpush1.xpose.msra.mxu0 0.0
  %115 = vmatprep.subr.mxu0 0.0
  %116 = vmatpush1.xpose.msra.mxu0 0.0
  %117 = vmatprep.subr.mxu0 0.0
  %118 = vmatpush1.xpose.msra.mxu0 0.0
  %119 = vmatprep.subr.mxu0 0.0
  %120 = vmatpush1.xpose.msra.mxu0 0.0
  %121 = vmatprep.subr.mxu0 0.0
  %122 = vmatpush1.xpose.msra.mxu0 0.0
  %123 = vmatprep.subr.mxu0 0.0
  %124 = vmatpush1.xpose.msra.mxu0 0.0
  %125 = vmatprep.subr.mxu0 0.0
  %126 = vmatpush1.xpose.msra.mxu0 0.0
  %127 = vmatprep.subr.mxu0 0.0
  %128 = vmatpush1.xpose.msra.mxu0 0.0
  %129 = vmatprep.subr.mxu0 0.0
  %130 = vmatpush1.xpose.msra.mxu0 0.0
  %131 = vmatprep.subr.mxu0 0.0
  %132 = vmatpush1.xpose.msra.mxu0 0.0
  %133 = vmatprep.subr.mxu0 0.0
  %134 = vmatpush1.xpose.msra.mxu0 0.0
  %135 = vmatprep.subr.mxu0 0.0
  %136 = vmatpush1.xpose.msra.mxu0 %v103
  %137 = vmatprep.subr.mxu0 0.0
  %138 = vmatpush2.xpose.msra.mxu0 0.0
  %139 = vmatprep.subr.mxu0 0.0
  %140 = vmatpush2.xpose.msra.mxu0 0.0
  %141 = vmatprep.subr.mxu0 0.0
  %142 = vmatpush2.xpose.msra.mxu0 0.0
  %143 = vmatprep.subr.mxu0 0.0
  %144 = vmatpush2.xpose.msra.mxu0 0.0
  %145 = vmatprep.subr.mxu0 0.0
  %146 = vmatpush2.xpose.msra.mxu0 0.0
  %147 = vmatprep.subr.mxu0 0.0
  %148 = vmatpush2.xpose.msra.mxu0 0.0
  %149 = vmatprep.subr.mxu0 0.0
  %150 = vmatpush2.xpose.msra.mxu0 0.0
  %151 = vmatprep.subr.mxu0 0.0
  %152 = vmatpush2.xpose.msra.mxu0 0.0
  %153 = vmatprep.subr.mxu0 0.0
  %154 = vmatpush2.xpose.msra.mxu0 0.0
  %155 = vmatprep.subr.mxu0 0.0
  %156 = vmatpush2.xpose.msra.mxu0 0.0
  %157 = vmatprep.subr.mxu0 0.0
  %158 = vmatpush2.xpose.msra.mxu0 0.0
  %159 = vmatprep.subr.mxu0 0.0
  %160 = vmatpush2.xpose.msra.mxu0 0.0
  %161 = vmatprep.subr.mxu0 0.0
  %162 = vmatpush2.xpose.msra.mxu0 0.0
  %163 = vmatprep.subr.mxu0 0.0
  %164 = vmatpush2.xpose.msra.mxu0 0.0
  %165 = vmatprep.subr.mxu0 0.0
  %166 = vmatpush2.xpose.msra.mxu0 0.0
  %167 = vmatprep.subr.mxu0 0.0
  %168 = vmatpush2.xpose.msra.mxu0 0.0
  %169 = vmatprep.mubr.f32.mxu0 0.0
  %170 = vmatmul.mubr.f32.gmra.mxu0 %v79
  %v171 = vpop.f32.mrf.mxu0
  %v172 = vadd.f32 %v40, %v171
  %v173 = vpop.f32.mrf.mxu0
  %174 = vmatprep.mubr.f32.mxu0 0.0
  %175 = vmatmul.mubr.f32.gmra.mxu0 %v82
  %v176 = vpop.f32.mrf.mxu0
  %v177 = vadd.f32 %v45, %v176
  %v178 = vpop.f32.mrf.mxu0
  %179 = vmatprep.mubr.f32.mxu0 0.0
  %180 = vmatmul.mubr.f32.gmra.mxu0 %v85
  %v181 = vpop.f32.mrf.mxu0
  %v182 = vadd.f32 %v50, %v181
  %v183 = vpop.f32.mrf.mxu0
  %184 = vmatprep.mubr.f32.mxu0 0.0
  %185 = vmatmul.mubr.f32.gmra.mxu0 %v88
  %v186 = vpop.f32.mrf.mxu0
  %v187 = vadd.f32 %v55, %v186
  %v188 = vpop.f32.mrf.mxu0
  %189 = vmatprep.mubr.f32.mxu0 0.0
  %190 = vmatmul.mubr.f32.gmra.mxu0 %v91
  %v191 = vpop.f32.mrf.mxu0
  %v192 = vadd.f32 %v60, %v191
  %v193 = vpop.f32.mrf.mxu0
  %194 = vmatprep.mubr.f32.mxu0 0.0
  %195 = vmatmul.mubr.f32.gmra.mxu0 %v94
  %v196 = vpop.f32.mrf.mxu0
  %v197 = vadd.f32 %v65, %v196
  %v198 = vpop.f32.mrf.mxu0
  %199 = vmatprep.mubr.f32.mxu0 0.0
  %200 = vmatmul.mubr.f32.gmra.mxu0 %v97
  %v201 = vpop.f32.mrf.mxu0
  %v202 = vadd.f32 %v70, %v201
  %v203 = vpop.f32.mrf.mxu0
  %204 = vmatprep.mubr.f32.mxu0 0.0
  %205 = vmatmul.mubr.f32.gmra.mxu0 %v100
  %v206 = vpop.f32.mrf.mxu0
  %v207 = vadd.f32 %v75, %v206
  %v208 = vpop.f32.mrf.mxu0
  %209 = vdwg.mxu0
  %v210 = vmax.f32 %v172, 0.0
  %v211 = vmax.f32 %v177, 0.0
  %v212 = vmax.f32 %v182, 0.0
  %v213 = vmax.f32 %v187, 0.0
  %v214 = vmax.f32 %v192, 0.0
  %v215 = vmax.f32 %v197, 0.0
  %v216 = vmax.f32 %v202, 0.0
  %v217 = vmax.f32 %v207, 0.0
  %v218 = vld [vmem:[%s3] sm:$0xff]
  %v219 = vld [vmem:[%s3 + $0x8] sm:$0x1]
  %v220 = vld [vmem:[%s4] sm:$0xff]
  %v221 = vld [vmem:[%s4 + $0x8] sm:$0x1]
  %223 = vset.pattern.permute.xlu0 0
  %224 = vperm.xlu0 %223, %v220
  %v225 = vpop.permute.xlu0 %224
  %228 = vset.pattern.permute.xlu0 0
  %229 = vperm.xlu0 %228, %v221
  %v230 = vpop.permute.xlu0 %229
  %vm232 = vcmask 523264
  %v234 = vsel %vm232, %v218, 0
  %v237 = vsel %vm232, %v219, 0
  %239 = vmatprep.subr.mxu0 0.0
  %240 = vmatpush1.msra.mxu0 0.0
  %241 = vmatprep.subr.mxu0 0.0
  %242 = vmatpush1.msra.mxu0 0.0
  %243 = vmatprep.subr.mxu0 0.0
  %244 = vmatpush1.msra.mxu0 0.0
  %245 = vmatprep.subr.mxu0 0.0
  %246 = vmatpush1.msra.mxu0 0.0
  %247 = vmatprep.subr.mxu0 0.0
  %248 = vmatpush1.msra.mxu0 0.0
  %249 = vmatprep.subr.mxu0 0.0
  %250 = vmatpush1.msra.mxu0 0.0
  %251 = vmatprep.subr.mxu0 0.0
  %252 = vmatpush1.msra.mxu0 0.0
  %253 = vmatprep.subr.mxu0 0.0
  %254 = vmatpush1.msra.mxu0 0.0
  %255 = vmatprep.subr.mxu0 0.0
  %256 = vmatpush1.msra.mxu0 %v217
  %257 = vmatprep.subr.mxu0 0.0
  %258 = vmatpush1.msra.mxu0 %v216
  %259 = vmatprep.subr.mxu0 0.0
  %260 = vmatpush1.msra.mxu0 %v215
  %261 = vmatprep.subr.mxu0 0.0
  %262 = vmatpush1.msra.mxu0 %v214
  %263 = vmatprep.subr.mxu0 0.0
  %264 = vmatpush1.msra.mxu0 %v213
  %265 = vmatprep.subr.mxu0 0.0
  %266 = vmatpush1.msra.mxu0 %v212
  %267 = vmatprep.subr.mxu0 0.0
  %268 = vmatpush1.msra.mxu0 %v211
  %269 = vmatprep.subr.mxu0 0.0
  %270 = vmatpush1.msra.mxu0 %v210
  %271 = vmatprep.subr.mxu0 0.0
  %272 = vmatpush2.msra.mxu0 0.0
  %273 = vmatprep.subr.mxu0 0.0
  %274 = vmatpush2.msra.mxu0 0.0
  %275 = vmatprep.subr.mxu0 0.0
  %276 = vmatpush2.msra.mxu0 0.0
  %277 = vmatprep.subr.mxu0 0.0
  %278 = vmatpush2.msra.mxu0 0.0
  %279 = vmatprep.subr.mxu0 0.0
  %280 = vmatpush2.msra.mxu0 0.0
  %281 = vmatprep.subr.mxu0 0.0
  %282 = vmatpush2.msra.mxu0 0.0
  %283 = vmatprep.subr.mxu0 0.0
  %284 = vmatpush2.msra.mxu0 0.0
  %285 = vmatprep.subr.mxu0 0.0
  %286 = vmatpush2.msra.mxu0 0.0
  %287 = vmatprep.subr.mxu0 0.0
  %288 = vmatpush2.msra.mxu0 0.0
  %289 = vmatprep.subr.mxu0 0.0
  %290 = vmatpush2.msra.mxu0 0.0
  %291 = vmatprep.subr.mxu0 0.0
  %292 = vmatpush2.msra.mxu0 0.0
  %293 = vmatprep.subr.mxu0 0.0
  %294 = vmatpush2.msra.mxu0 0.0
  %295 = vmatprep.subr.mxu0 0.0
  %296 = vmatpush2.msra.mxu0 0.0
  %297 = vmatprep.subr.mxu0 0.0
  %298 = vmatpush2.msra.mxu0 0.0
  %299 = vmatprep.subr.mxu0 0.0
  %300 = vmatpush2.msra.mxu0 0.0
  %301 = vmatprep.subr.mxu0 0.0
  %302 = vmatpush2.msra.mxu0 0.0
  %303 = vmatprep.mubr.f32.mxu0 0.0
  %304 = vmatmul.mubr.f32.gmra.mxu0 %v234
  %v305 = vpop.f32.mrf.mxu0
  %v306 = vadd.f32 %v225, %v305
  %v307 = vpop.f32.mrf.mxu0
  %308 = vmatprep.mubr.f32.mxu0 0.0
  %309 = vmatmul.mubr.f32.gmra.mxu0 %v237
  %v310 = vpop.f32.mrf.mxu0
  %v311 = vadd.f32 %v230, %v310
  %v312 = vpop.f32.mrf.mxu0
  %313 = vdwg.mxu0
  %v314 = vxor.u32 %v306, 2147483648
  %v315 = vxor.u32 %v311, 2147483648
  %v316 = vmul.f32 %v314, 1.442695
  %v317 = vpow.pop %v316
  %v318 = vmul.f32 %v315, 1.442695
  %v319 = vpow.pop %v318
  %v320 = vadd.f32 %v317, 1.0
  %v321 = vadd.f32 %v319, 1.0
  %v322 = vrcp.pop %v320
  %v323 = vmul.f32 1.0, %v322
  %v324 = vrcp.pop %v321
  %v325 = vmul.f32 1.0, %v324
  %vm326 = vcmask 31744
  %327 = vst.msk [vmem:[%s5] sm:$0xff] %vm326, %v323
  %vm328 = vcmask 24576
  %329 = vst.msk [vmem:[%s5 + $0x8] sm:$0x1] %vm328, %v325
  // Predicated region
  $region22: #{tpu_custom_call.1} parent=0 // pred_check
    _
  $region23: #{tpu_custom_call.1} parent=0 // pred_check_branch
    %331 = sbr.rel (0) target = $region25
  $region24: #{tpu_custom_call.1} parent=0 // pred_region
    _
  $region25: #{tpu_custom_call.1} parent=0 // pred_fallthru
    _
  // Predicated region
  $region26: #{tpu_custom_call.1} parent=0 // pred_check
    _
  $region27: #{tpu_custom_call.1} parent=0 // pred_check_branch
    %333 = sbr.rel (0) target = $region29
  $region28: #{tpu_custom_call.1} parent=0 // pred_region
    _
  $region29: #{tpu_custom_call.1} parent=0 // pred_fallthru
    _

</llo_original>
